<compile_context>
chip_gen: v6e
topology: v6e:2x2x1
jax: 0.10.0
libtpu: 0.0.40
codegen_flags: <defaults>
</compile_context>

<pallas_src>
import numpy as np
import jax
import jax.numpy as jnp
from jax.experimental import pallas as pl
from jax.experimental.pallas import tpu as pltpu


# ---------------------------------------------------------------------------
# Parameter construction (matches STPool._get_skeleton_pooling).
# ---------------------------------------------------------------------------
def make_skeleton_pool(dataset="t2m", depth=0):
    if depth == 0:
        if dataset == "t2m":
            j_out, j_in = 12, 22
            mapping = [[(0, 1, 2, 3), 0], [(0, 1, 4), 1], [(4, 7, 10), 2],
                       [(0, 2, 5), 3], [(5, 8, 11), 4], [(0, 3, 6, 9), 5],
                       [(9, 6, 12, 13, 14), 6], [(9, 13, 16), 7],
                       [(16, 18, 20), 8], [(9, 14, 17), 9],
                       [(17, 19, 21), 10], [(9, 12, 15), 11]]
        else:
            j_out, j_in = 12, 21
            mapping = [[(0, 1, 11, 16), 0], [(0, 16, 17, 18), 1],
                       [(17, 18, 19, 20), 2], [(0, 11, 12, 13), 3],
                       [(12, 13, 14, 15), 4], [(0, 1, 2, 3), 5],
                       [(2, 3, 5, 8, 4), 6], [(3, 8, 9), 7], [(8, 9, 10), 8],
                       [(3, 5, 6), 9], [(5, 6, 7), 10], [(3, 4), 11]]
        weight = np.zeros((j_out, j_in), dtype=np.float32)
    elif depth == 1:
        weight = np.zeros((7, 12), dtype=np.float32)
        mapping = [[(0, 1, 3, 5), 0], [(0, 1, 2), 1], [(0, 3, 4), 2],
                   [(0, 5, 6), 3], [(6, 7, 8), 4], [(6, 9, 10), 5], [(6, 11), 6]]
    else:
        weight = np.ones((7, 7), dtype=np.float32)
        mapping = [[(0, 1, 2, 3), 0], [(0, 1), 1], [(0, 2), 2], [(0, 3), 3],
                   [(3, 4), 4], [(3, 5), 5], [(3, 6), 6]]
    for joints, idx in mapping:
        weight[idx, list(joints)] = 1.0
    weight = weight / weight.sum(axis=1, keepdims=True)
    # TODO(synk): new_edges / adj_list_to_edges are graph metadata only (unused
    # in forward), so they are not reproduced here.
    return weight  # numpy float32, [J_out, J_in]


def make_fused_weight(skeleton_pool, D, dtype=jnp.bfloat16):
    """Precompute W_big = kron((0.5*[W|W]).T, I_D) once at module init.

    Hoisted out of the per-call path (pure numpy); ~270 KB in bf16 for t2m
    depth-0, D=16.
    """
    w = np.asarray(skeleton_pool, dtype=np.float32)            # [J_out, J_in]
    w_pair = 0.5 * np.concatenate([w, w], axis=1)              # [J_out, 2*J_in]
    w_big = np.kron(w_pair.T, np.eye(D, dtype=np.float32))     # [2*J_in*D, J_out*D]
    return jnp.asarray(w_big, dtype=dtype)


# ---------------------------------------------------------------------------
# Pallas kernel: one lane-dense bf16 GEMM per row tile (skeleton pool +
# temporal average are both baked into the fused weight), f32 accumulation.
# ---------------------------------------------------------------------------
def _stpool_kernel(w_ref, x_ref, o_ref):
    # w_ref: [K, N] fused weight (bf16)   x_ref: [TM, K] row tile (bf16)
    # o_ref: [TM, N] output tile (input dtype)
    o_ref[...] = jnp.dot(x_ref[...], w_ref[...],
                         preferred_element_type=jnp.float32).astype(o_ref.dtype)


def _round_up(v, m):
    return ((v + m - 1) // m) * m


def stpool_forward(x, w_big, *, row_tile=2048, vmem_limit_bytes=32 * 1024 * 1024):
    """x: [B, T, J_in, D], w_big: [2*J_in*D, J_out*D] -> out: [B, T//2, J_out, D]."""
    B, T, J_in, D = x.shape
    T_out = T // 2
    K = 2 * J_in * D
    N = w_big.shape[1]
    J_out = N // D
    assert w_big.shape[0] == K, (w_big.shape, K)

    x = x[:, : 2 * T_out]          # AvgPool1d(k=2, s=2) drops a trailing odd frame
    out_dtype = x.dtype
    M = B * T_out

    # Contiguous (free) reshape: row = (b, frame_pair), col = (pair, joint, feat).
    # Cast to bf16: halves HBM traffic; accumulation stays f32 in the kernel.
    x2 = x.reshape(M, K).astype(jnp.bfloat16)

    # Row-tile selection:
    #  * multiples of 8 sublanes,
    #  * >= 2 grid steps when possible so both v7x TensorCores get work,
    #  * capped at row_tile (default 2048: ~11 MB double-buffered working set,
    #    fits the 16 MiB v5e scoped-VMEM default and v7x's 64 MiB physical VMEM).
    row_tile = max(8, (row_tile // 8) * 8)
    if M <= row_tile:
        tm = min(_round_up(pl.cdiv(M, 2), 8), _round_up(M, 8))
    else:
        tm = row_tile
    grid = (pl.cdiv(M, tm),)

    out2 = pl.pallas_call(
        _stpool_kernel,
        out_shape=jax.ShapeDtypeStruct((M, N), out_dtype),
        grid_spec=pltpu.PrefetchScalarGridSpec(
            num_scalar_prefetch=0,
            grid=grid,
            in_specs=[
                # Constant block index -> the fused weight is DMA'd only once.
                pl.BlockSpec((K, N), lambda i: (0, 0)),
                pl.BlockSpec((tm, K), lambda i: (i, 0)),
            ],
            out_specs=pl.BlockSpec((tm, N), lambda i: (i, 0)),
        ),
        compiler_params=pltpu.CompilerParams(
            dimension_semantics=("parallel",),
            vmem_limit_bytes=vmem_limit_bytes,
        ),
    )(w_big, x2)

    return out2.reshape(B, T_out, J_out, D)


# ---------------------------------------------------------------------------
# Reference (plain JAX, f32) for verification
# ---------------------------------------------------------------------------
def stpool_reference(x, skeleton_pool):
    w = jnp.asarray(np.asarray(skeleton_pool), dtype=jnp.float32)
    y = jnp.einsum("ji,btid->btjd", w, x.astype(jnp.float32))
    B, T, J_out, D = y.shape
    y = y[:, : (T // 2) * 2]
    y = y.reshape(B, T // 2, 2, J_out, D)
    return jnp.mean(y, axis=2)


if __name__ == "__main__":
    key = jax.random.PRNGKey(0)
    k1, k2 = jax.random.split(key)

    w_np = make_skeleton_pool("t2m", depth=0)            # [12, 22]
    D = 16
    w_big = make_fused_weight(w_np, D)                   # precomputed once (bf16)

    # Test 1: standard shape, >= 2 grid steps even though M is small.
    B, T, J_in = 2, 64, 22                               # t2m skeleton, depth=0
    x = jax.random.normal(k1, (B, T, J_in, D), dtype=jnp.float32)
    ref = stpool_reference(x, w_np)
    out = jax.block_until_ready(stpool_forward(x, w_big))
    assert out.shape == (B, T // 2, w_np.shape[0], D), out.shape
    # bf16 GEMM inputs (f32 accumulation) -> relaxed tolerance vs f32 reference.
    np.testing.assert_allclose(np.asarray(out), np.asarray(ref),
                               rtol=2e-2, atol=2e-2)

    # Test 2: odd T (trailing frame dropped) and M % tm != 0 edge grid block.
    T2 = 51                                              # T_out=25 -> M=50, tm=32
    x2 = jax.random.normal(k2, (B, T2, J_in, D), dtype=jnp.float32)
    ref2 = stpool_reference(x2, w_np)
    out2 = jax.block_until_ready(stpool_forward(x2, w_big))
    assert out2.shape == (B, T2 // 2, w_np.shape[0], D), out2.shape
    np.testing.assert_allclose(np.asarray(out2), np.asarray(ref2),
                               rtol=2e-2, atol=2e-2)

    # Test 3: small tile to exercise the multi-step pipelined grid path.
    out3 = jax.block_until_ready(stpool_forward(x, w_big, row_tile=16))
    np.testing.assert_allclose(np.asarray(out3), np.asarray(ref),
                               rtol=2e-2, atol=2e-2)

    print("KERNEL_OK")
</pallas_src>

<mosaic_0001>
module attributes {stable_mosaic.version = 11 : i64} {
  func.func @_stpool_kernel(%arg0: i32, %arg1: memref<704x192xbf16, #tpu.memory_space<vmem>>, %arg2: memref<32x704xbf16, #tpu.memory_space<vmem>>, %arg3: memref<32x192xf32, #tpu.memory_space<vmem>>) attributes {dimension_semantics = [#tpu.dimension_semantics<parallel>], iteration_bounds = array<i64: 2>, scalar_prefetch = 0 : i64, scratch_operands = 0 : i64, tpu.core_type = #tpu.core_type<tc>, window_params = [{pipeline_mode = #tpu.pipeline_mode<synchronous>, transform_indices = @transform_0, window_bounds = array<i64: 704, 192>}, {transform_indices = @transform_1, window_bounds = array<i64: 32, 704>}, {transform_indices = @transform_2, window_bounds = array<i64: 32, 192>}]} {
    %c0 = arith.constant 0 : index
    %c0_0 = arith.constant 0 : index
    %0 = vector.load %arg2[%c0, %c0_0] : memref<32x704xbf16, #tpu.memory_space<vmem>>, vector<32x704xbf16>
    %c0_1 = arith.constant 0 : index
    %c0_2 = arith.constant 0 : index
    %1 = vector.load %arg1[%c0_1, %c0_2] : memref<704x192xbf16, #tpu.memory_space<vmem>>, vector<704x192xbf16>
    %cst = arith.constant dense<0.000000e+00> : vector<32x192xf32>
    %2 = tpu.matmul %0, %1, %cst {dimension_numbers = #tpu.dot_dimension_numbers<[1], [0], [0], [1], [0, 0, 1, 1], [], []>} : vector<32x704xbf16>, vector<704x192xbf16>, vector<32x192xf32> -> vector<32x192xf32>
    %c0_3 = arith.constant 0 : index
    %c0_4 = arith.constant 0 : index
    %3 = vector.load %arg3[%c0_3, %c0_4] : memref<32x192xf32, #tpu.memory_space<vmem>>, vector<32x192xf32>
    tpu.vector_store %arg3[%c0_3, %c0_4], %2 {strides = array<i32>} : memref<32x192xf32, #tpu.memory_space<vmem>>, vector<32x192xf32>,
    return
  }
  func.func @transform_0(%arg0: i32) -> (i32, i32) {
    %c0_i32 = arith.constant 0 : i32
    %c0_i32_0 = arith.constant 0 : i32
    %c0_i32_1 = arith.constant 0 : i32
    return %c0_i32, %c0_i32_0 : i32, i32
  }
  func.func @transform_1(%arg0: i32) -> (i32, i32) {
    %c0_i32 = arith.constant 0 : i32
    %c0_i32_0 = arith.constant 0 : i32
    return %arg0, %c0_i32 : i32, i32
  }
  func.func @transform_2(%arg0: i32) -> (i32, i32) {
    %c0_i32 = arith.constant 0 : i32
    %c0_i32_0 = arith.constant 0 : i32
    return %arg0, %c0_i32 : i32, i32
  }
}

</mosaic_0001>

<llo_original>
// kernel: tpu_custom_call.1
$region0: #{tpu_custom_call.1}
  #allocation0 [shape = 'u32[]', space=smem, size = 0x4, offset = 0x4, fixed_abs, tag = 'smem constant byte address 0x4 - core index']
  #allocation1 [shape = 'u32[144,128]{1,0:T(1,128)}', space=vmem, size = 0x12000, scoped, tag = 'internal scratch']
  %s0 = inlined_call_operand.vmem [shape: bf16[704,192], index: 0, kind: input, shape index: {}]
  %s1 = inlined_call_operand.vmem [shape: bf16[64,704], index: 1, kind: input, shape index: {}]
  %s2 = inlined_call_operand.hbm [shape: f32[64,192], index: 2, kind: output, shape index: {}]
  %s3 = sld [smem:[#allocation0]]
  $region41: #{tpu_custom_call.1} parent=0
    _
  %s5 = ssub.s32 1, %s3
  %s6 = scalar_select 0, %s5, %s3
  $region1: #{tpu_custom_call.1} parent=0
    #allocation2 [shape = 'u8[65536]{0}', space=vmem, size = 0x10000, scoped, tag = 'output window, operand 0']
    #allocation3 [shape = 's32[2]{0}', space=sflag, size = 0x8, scoped, tag = 'scoped memory for tpu_custom_call.1']
    %7 = vsyncpa [#allocation3], 0
    %s8 = scalar_lea.sflag [#allocation3], 1
    %9 = vsyncpa %s8, 0
    loop: start=0, step=1, limit=4
    $region2: #{tpu_custom_call.1} parent=1 // loop_pre_header
      _
    $region3: #{tpu_custom_call.1} parent=1 // loop_header
      %s11 = sphi 0, %s15
      %p12 = scmp.ge.s32.totalorder %s11, 4
      %s19 = sphi 0, %s19
      %s21 = sphi 0, %s19
      %s22 = sphi 0, %s21
      %s36 = sphi 0, %s22
      %s42 = sphi 0, %s44
      %s45 = sphi 0, %s42
      %s46 = sphi 0, %s45
      %s62 = sphi 0, %s46
      %s68 = sphi 0, %s70
      %s71 = sphi 0, %s68
      %s72 = sphi 0, %s71
      %s88 = sphi 0, %s72
    $region4: #{tpu_custom_call.1} parent=1 // loop_header_branch
      %14 = sbr.rel (%p12) target = $region8
    $region5: #{tpu_custom_call.1} parent=1 // loop_body
      %s16 = ssub.s32 %s11, 1
      %s17 = ssub.s32 %s11, 2
      %s18 = sadd.s32 %s11, 1
      %s20 = sadd.s32 %s19, 1
      %p23 = scmp.eq.s32.totalorder %s11, 1
      %p24 = scmp.ne.s32.totalorder %s19, %s21
      %p25 = scmp.eq.s32.totalorder %s11, 0
      %p26 = por %p24, %p25
      %p27 = scmp.ne.s32.totalorder %s19, %s21
      %p28 = scmp.eq.s32.totalorder %s16, 1
      %p29 = por %p27, %p28
      %p30 = scmp.ne.s32.totalorder %s21, %s22
      %p31 = scmp.eq.s32.totalorder %s16, 0
      %p32 = por %p30, %p31
      %p33 = scmp.ne.s32.totalorder %s21, %s22
      %p34 = scmp.eq.s32.totalorder %s17, 1
      %p35 = por %p33, %p34
      %p37 = scmp.ne.s32.totalorder %s22, %s36
      %p38 = scmp.eq.s32.totalorder %s17, 0
      %p39 = por %p37, %p38
      %s40 = ssub.s32 %s11, %s18
      %p41 = scmp.eq.s32.totalorder %s40, 0
      %s43 = sadd.s32 %s42, 1
      %s44 = scalar_select %p41, %s42, %s43
      %p47 = pneg %p41
      %p48 = scmp.eq.s32.totalorder %s11, 1
      %p49 = por %p47, %p48
      %p50 = scmp.ne.s32.totalorder %s42, %s45
      %p51 = scmp.eq.s32.totalorder %s11, 0
      %p52 = por %p50, %p51
      %p53 = scmp.ne.s32.totalorder %s42, %s45
      %p54 = scmp.eq.s32.totalorder %s16, 1
      %p55 = por %p53, %p54
      %p56 = scmp.ne.s32.totalorder %s45, %s46
      %p57 = scmp.eq.s32.totalorder %s16, 0
      %p58 = por %p56, %p57
      %p59 = scmp.ne.s32.totalorder %s45, %s46
      %p60 = scmp.eq.s32.totalorder %s17, 1
      %p61 = por %p59, %p60
      %p63 = scmp.ne.s32.totalorder %s46, %s62
      %p64 = scmp.eq.s32.totalorder %s17, 0
      %p65 = por %p63, %p64
      %s66 = ssub.s32 %s11, %s18
      %p67 = scmp.eq.s32.totalorder %s66, 0
      %s69 = sadd.s32 %s68, 1
      %s70 = scalar_select %p67, %s68, %s69
      %p73 = pneg %p67
      %p74 = scmp.eq.s32.totalorder %s11, 1
      %p75 = por %p73, %p74
      %p76 = scmp.ne.s32.totalorder %s68, %s71
      %p77 = scmp.eq.s32.totalorder %s11, 0
      %p78 = por %p76, %p77
      %p79 = scmp.ne.s32.totalorder %s68, %s71
      %p80 = scmp.eq.s32.totalorder %s16, 1
      %p81 = por %p79, %p80
      %p82 = scmp.ne.s32.totalorder %s71, %s72
      %p83 = scmp.eq.s32.totalorder %s16, 0
      %p84 = por %p82, %p83
      %p85 = scmp.ne.s32.totalorder %s71, %s72
      %p86 = scmp.eq.s32.totalorder %s17, 1
      %p87 = por %p85, %p86
      %p89 = scmp.ne.s32.totalorder %s72, %s88
      %p90 = scmp.eq.s32.totalorder %s17, 0
      %p91 = por %p89, %p90
      %p92 = scmp.le.s32.totalorder 1, %s11
      %p93 = scmp.lt.s32.totalorder %s11, 3
      %p94 = pnand %p92, %p93
      %p95 = pneg %p94
      // Predicated region
      $region9: #{tpu_custom_call.1} parent=5 // pred_check
        _
      $region10: #{tpu_custom_call.1} parent=5 // pred_check_branch
        %97 = sbr.rel (%p94) target = $region12
      $region11: #{tpu_custom_call.1} parent=5 // pred_region
        %s98 = ssub.s32 %s11, 1
        // Predicated region
        $region13: #{tpu_custom_call.1} parent=11 // pred_check
          %p99 = pneg %p32
        $region14: #{tpu_custom_call.1} parent=11 // pred_check_branch
          %101 = sbr.rel (%p99) target = $region16
        $region15: #{tpu_custom_call.1} parent=11 // pred_region
          _
        $region16: #{tpu_custom_call.1} parent=11 // pred_fallthru
          _
      $region12: #{tpu_custom_call.1} parent=5 // pred_fallthru
        _
      %p102 = scmp.lt.s32.totalorder %s11, 2
      // Predicated region
      $region17: #{tpu_custom_call.1} parent=5 // pred_check
        %p103 = pneg %p102
      $region18: #{tpu_custom_call.1} parent=5 // pred_check_branch
        %105 = sbr.rel (%p103) target = $region20
      $region19: #{tpu_custom_call.1} parent=5 // pred_region
        // Predicated region
        $region21: #{tpu_custom_call.1} parent=19 // pred_check
          %p106 = pneg %p52
        $region22: #{tpu_custom_call.1} parent=19 // pred_check_branch
          %108 = sbr.rel (%p106) target = $region24
        $region23: #{tpu_custom_call.1} parent=19 // pred_region
          %s109 = smul.u32 4, %s11
          %p110 = scmp.lt.s32.totalorder %s109, 7
          %s111 = scalar_select %p110, %s109, 7
          %s112 = smul.addr %s111, 6
          %s113 = smul.addr %s112, 4
          %s114 = scalar_lea.vmem %s1, %s113
          %s115 = smul.u32 4, %s11
        $region24: #{tpu_custom_call.1} parent=19 // pred_fallthru
          _
      $region20: #{tpu_custom_call.1} parent=5 // pred_fallthru
        _
      %p116 = scmp.le.s32.totalorder 1, %s11
      %p117 = scmp.lt.s32.totalorder %s11, 3
      %p118 = pnand %p116, %p117
      %p119 = pneg %p118
      // Predicated region
      $region25: #{tpu_custom_call.1} parent=5 // pred_check
        _
      $region26: #{tpu_custom_call.1} parent=5 // pred_check_branch
        %121 = sbr.rel (%p118) target = $region28
      $region27: #{tpu_custom_call.1} parent=5 // pred_region
        %s122 = ssub.s32 %s11, 1
        %p123 = pneg %p32
        %p124 = pneg %p29
        %s125 = smul.u32 4, %s16
        %p126 = scmp.lt.s32.totalorder %s125, 7
        %s127 = scalar_select %p126, %s125, 7
        %s128 = smul.addr %s127, 6
        %s129 = smul.addr %s128, 4
        %s130 = scalar_lea.vmem %s1, %s129
        %p131 = pneg %p58
        %p132 = pneg %p55
        %p133 = pneg %p84
        %p134 = pneg %p81
        %s135 = sand.u32 %s71, 1
        %s136 = scalar_lea.sflag [#allocation3], %s135
        %s137 = sand.u32 %s71, 1
        %s138 = smul.addr %s137, 64
        %s139 = scalar_lea.vmem [#allocation2], %s138
        %s140 = smul.u32 4, %s16
        %p141 = scmp.lt.s32.totalorder %s140, 7
        %s142 = scalar_select %p141, %s140, 7
        %s143 = smul.addr %s142, 6
        %s144 = smul.addr %s143, 4
        %s145 = scalar_lea.vmem %s1, %s144
        %s146 = smul.u32 4, %s16
        %s147 = smul.u32 4, %s16
        %v149 = vld [vmem:[%s145] sm:$0xff]
        %v150 = vld [vmem:[%s145 + $0x8] sm:$0xff]
        %v151 = vld [vmem:[%s145 + $0x10] sm:$0xff]
        %v152 = vld [vmem:[%s145 + $0x18] sm:$0xff]
        %v153 = vld [vmem:[%s145 + $0x20] sm:$0xff]
        %v154 = vld [vmem:[%s145 + $0x28] sm:$0xff]
        %v155 = vld [vmem:[%s145 + $0x30] sm:$0xff]
        %v156 = vld [vmem:[%s145 + $0x38] sm:$0xff]
        %v157 = vld [vmem:[%s145 + $0x40] sm:$0xff]
        %v158 = vld [vmem:[%s145 + $0x48] sm:$0xff]
        %v159 = vld [vmem:[%s145 + $0x50] sm:$0xff]
        %v160 = vld [vmem:[%s145 + $0x58] sm:$0xff]
        %v161 = vld [vmem:[%s0] sm:$0xff]
        %v162 = vld [vmem:[%s0 + $0x8] sm:$0xff]
        %v163 = vld [vmem:[%s0 + $0x10] sm:$0xff]
        %v164 = vld [vmem:[%s0 + $0x18] sm:$0xff]
        %v165 = vld [vmem:[%s0 + $0x20] sm:$0xff]
        %v166 = vld [vmem:[%s0 + $0x28] sm:$0xff]
        %v167 = vld [vmem:[%s0 + $0x30] sm:$0xff]
        %v168 = vld [vmem:[%s0 + $0x38] sm:$0xff]
        %v169 = vld [vmem:[%s0 + $0x40] sm:$0xff]
        %v170 = vld [vmem:[%s0 + $0x48] sm:$0xff]
        %v171 = vld [vmem:[%s0 + $0x50] sm:$0xff]
        %v172 = vld [vmem:[%s0 + $0x58] sm:$0xff]
        %v173 = vld [vmem:[%s0 + $0x60] sm:$0xff]
        %v174 = vld [vmem:[%s0 + $0x68] sm:$0xff]
        %v175 = vld [vmem:[%s0 + $0x70] sm:$0xff]
        %v176 = vld [vmem:[%s0 + $0x78] sm:$0xff]
        %v177 = vld [vmem:[%s0 + $0x80] sm:$0xff]
        %v178 = vld [vmem:[%s0 + $0x88] sm:$0xff]
        %v179 = vld [vmem:[%s0 + $0x90] sm:$0xff]
        %v180 = vld [vmem:[%s0 + $0x98] sm:$0xff]
        %v181 = vld [vmem:[%s0 + $0xa0] sm:$0xff]
        %v182 = vld [vmem:[%s0 + $0xa8] sm:$0xff]
        %v183 = vld [vmem:[%s0 + $0xb0] sm:$0xff]
        %v184 = vld [vmem:[%s0 + $0xb8] sm:$0xff]
        %v185 = vld [vmem:[%s0 + $0xc0] sm:$0xff]
        %v186 = vld [vmem:[%s0 + $0xc8] sm:$0xff]
        %v187 = vld [vmem:[%s0 + $0xd0] sm:$0xff]
        %v188 = vld [vmem:[%s0 + $0xd8] sm:$0xff]
        %v189 = vld [vmem:[%s0 + $0xe0] sm:$0xff]
        %v190 = vld [vmem:[%s0 + $0xe8] sm:$0xff]
        %v191 = vld [vmem:[%s0 + $0xf0] sm:$0xff]
        %v192 = vld [vmem:[%s0 + $0xf8] sm:$0xff]
        %v193 = vld [vmem:[%s0 + $0x100] sm:$0xff]
        %v194 = vld [vmem:[%s0 + $0x108] sm:$0xff]
        %v195 = vld [vmem:[%s0 + $0x110] sm:$0xff]
        %v196 = vld [vmem:[%s0 + $0x118] sm:$0xff]
        %v197 = vld [vmem:[%s0 + $0x120] sm:$0xff]
        %v198 = vld [vmem:[%s0 + $0x128] sm:$0xff]
        %v199 = vld [vmem:[%s0 + $0x130] sm:$0xff]
        %v200 = vld [vmem:[%s0 + $0x138] sm:$0xff]
        %v201 = vld [vmem:[%s0 + $0x140] sm:$0xff]
        %v202 = vld [vmem:[%s0 + $0x148] sm:$0xff]
        %v203 = vld [vmem:[%s0 + $0x150] sm:$0xff]
        %v204 = vld [vmem:[%s0 + $0x158] sm:$0xff]
        %v205 = vld [vmem:[%s0 + $0x160] sm:$0xff]
        %v206 = vld [vmem:[%s0 + $0x168] sm:$0xff]
        %v207 = vld [vmem:[%s0 + $0x170] sm:$0xff]
        %v208 = vld [vmem:[%s0 + $0x178] sm:$0xff]
        %v209 = vld [vmem:[%s0 + $0x180] sm:$0xff]
        %v210 = vld [vmem:[%s0 + $0x188] sm:$0xff]
        %v211 = vld [vmem:[%s0 + $0x190] sm:$0xff]
        %v212 = vld [vmem:[%s0 + $0x198] sm:$0xff]
        %v213 = vld [vmem:[%s0 + $0x1a0] sm:$0xff]
        %v214 = vld [vmem:[%s0 + $0x1a8] sm:$0xff]
        %v215 = vld [vmem:[%s0 + $0x1b0] sm:$0xff]
        %v216 = vld [vmem:[%s0 + $0x1b8] sm:$0xff]
        %v217 = vld [vmem:[%s0 + $0x1c0] sm:$0xff]
        %v218 = vld [vmem:[%s0 + $0x1c8] sm:$0xff]
        %v219 = vld [vmem:[%s0 + $0x1d0] sm:$0xff]
        %v220 = vld [vmem:[%s0 + $0x1d8] sm:$0xff]
        %v221 = vld [vmem:[%s0 + $0x1e0] sm:$0xff]
        %v222 = vld [vmem:[%s0 + $0x1e8] sm:$0xff]
        %v223 = vld [vmem:[%s0 + $0x1f0] sm:$0xff]
        %v224 = vld [vmem:[%s0 + $0x1f8] sm:$0xff]
        %v225 = vld [vmem:[%s0 + $0x200] sm:$0xff]
        %v226 = vld [vmem:[%s0 + $0x208] sm:$0xff]
        %v227 = vld [vmem:[%s0 + $0x210] sm:$0xff]
        %v228 = vld [vmem:[%s0 + $0x218] sm:$0xff]
        %v229 = vld [vmem:[%s0 + $0x220] sm:$0xff]
        %v230 = vld [vmem:[%s0 + $0x228] sm:$0xff]
        %v231 = vld [vmem:[%s0 + $0x230] sm:$0xff]
        %v232 = vld [vmem:[%s0 + $0x238] sm:$0xff]
        %v233 = vld [vmem:[%s0 + $0x240] sm:$0xff]
        %v234 = vld [vmem:[%s0 + $0x248] sm:$0xff]
        %v235 = vld [vmem:[%s0 + $0x250] sm:$0xff]
        %v236 = vld [vmem:[%s0 + $0x258] sm:$0xff]
        %v237 = vld [vmem:[%s0 + $0x260] sm:$0xff]
        %v238 = vld [vmem:[%s0 + $0x268] sm:$0xff]
        %v239 = vld [vmem:[%s0 + $0x270] sm:$0xff]
        %v240 = vld [vmem:[%s0 + $0x278] sm:$0xff]
        %v241 = vld [vmem:[%s0 + $0x280] sm:$0xff]
        %v242 = vld [vmem:[%s0 + $0x288] sm:$0xff]
        %v243 = vld [vmem:[%s0 + $0x290] sm:$0xff]
        %v244 = vld [vmem:[%s0 + $0x298] sm:$0xff]
        %v245 = vld [vmem:[%s0 + $0x2a0] sm:$0xff]
        %v246 = vld [vmem:[%s0 + $0x2a8] sm:$0xff]
        %v247 = vld [vmem:[%s0 + $0x2b0] sm:$0xff]
        %v248 = vld [vmem:[%s0 + $0x2b8] sm:$0xff]
        %v261 = vunpack.c.l.b16 %v149
        %v262 = vunpack.c.h.b16 %v149
        %v263 = vunpack.c.l.b16 %v150
        %v264 = vunpack.c.h.b16 %v150
        %v265 = vunpack.c.l.b16 %v151
        %v266 = vunpack.c.h.b16 %v151
        %v267 = vunpack.c.l.b16 %v152
        %v268 = vunpack.c.h.b16 %v152
        %v269 = vunpack.c.l.b16 %v153
        %v270 = vunpack.c.h.b16 %v153
        %v271 = vunpack.c.l.b16 %v154
        %v272 = vunpack.c.h.b16 %v154
        %v273 = vunpack.c.l.b16 %v155
        %v274 = vunpack.c.h.b16 %v155
        %v275 = vunpack.c.l.b16 %v156
        %v276 = vunpack.c.h.b16 %v156
        %v277 = vunpack.c.l.b16 %v157
        %v278 = vunpack.c.h.b16 %v157
        %v279 = vunpack.c.l.b16 %v158
        %v280 = vunpack.c.h.b16 %v158
        %v281 = vunpack.c.l.b16 %v159
        %v282 = vunpack.c.h.b16 %v159
        %v283 = vunpack.c.l.b16 %v160
        %v284 = vunpack.c.h.b16 %v160
        %v285 = vpack.c.b16 %v267, %v261
        %v286 = vpack.c.b16 %v268, %v262
        %v287 = vpack.c.b16 %v269, %v263
        %v288 = vpack.c.b16 %v270, %v264
        %v289 = vpack.c.b16 %v271, %v265
        %v290 = vpack.c.b16 %v272, %v266
        %v291 = vpack.c.b16 %v279, %v273
        %v292 = vpack.c.b16 %v280, %v274
        %v293 = vpack.c.b16 %v281, %v275
        %v294 = vpack.c.b16 %v282, %v276
        %v295 = vpack.c.b16 %v283, %v277
        %v296 = vpack.c.b16 %v284, %v278
        %v395 = vunpack.c.l.b16 %v161
        %v396 = vunpack.c.h.b16 %v161
        %v397 = vunpack.c.l.b16 %v162
        %v398 = vunpack.c.h.b16 %v162
        %v399 = vunpack.c.l.b16 %v163
        %v400 = vunpack.c.h.b16 %v163
        %v401 = vunpack.c.l.b16 %v164
        %v402 = vunpack.c.h.b16 %v164
        %v403 = vunpack.c.l.b16 %v165
        %v404 = vunpack.c.h.b16 %v165
        %v405 = vunpack.c.l.b16 %v166
        %v406 = vunpack.c.h.b16 %v166
        %v407 = vunpack.c.l.b16 %v167
        %v408 = vunpack.c.h.b16 %v167
        %v409 = vunpack.c.l.b16 %v168
        %v410 = vunpack.c.h.b16 %v168
        %v411 = vunpack.c.l.b16 %v169
        %v412 = vunpack.c.h.b16 %v169
        %v413 = vunpack.c.l.b16 %v170
        %v414 = vunpack.c.h.b16 %v170
        %v415 = vunpack.c.l.b16 %v171
        %v416 = vunpack.c.h.b16 %v171
        %v417 = vunpack.c.l.b16 %v172
        %v418 = vunpack.c.h.b16 %v172
        %v419 = vunpack.c.l.b16 %v173
        %v420 = vunpack.c.h.b16 %v173
        %v421 = vunpack.c.l.b16 %v174
        %v422 = vunpack.c.h.b16 %v174
        %v423 = vunpack.c.l.b16 %v175
        %v424 = vunpack.c.h.b16 %v175
        %v425 = vunpack.c.l.b16 %v176
        %v426 = vunpack.c.h.b16 %v176
        %v427 = vunpack.c.l.b16 %v177
        %v428 = vunpack.c.h.b16 %v177
        %v429 = vunpack.c.l.b16 %v178
        %v430 = vunpack.c.h.b16 %v178
        %v431 = vunpack.c.l.b16 %v179
        %v432 = vunpack.c.h.b16 %v179
        %v433 = vunpack.c.l.b16 %v180
        %v434 = vunpack.c.h.b16 %v180
        %v435 = vunpack.c.l.b16 %v181
        %v436 = vunpack.c.h.b16 %v181
        %v437 = vunpack.c.l.b16 %v182
        %v438 = vunpack.c.h.b16 %v182
        %v439 = vunpack.c.l.b16 %v183
        %v440 = vunpack.c.h.b16 %v183
        %v441 = vunpack.c.l.b16 %v184
        %v442 = vunpack.c.h.b16 %v184
        %v443 = vunpack.c.l.b16 %v185
        %v444 = vunpack.c.h.b16 %v185
        %v445 = vunpack.c.l.b16 %v186
        %v446 = vunpack.c.h.b16 %v186
        %v447 = vunpack.c.l.b16 %v187
        %v448 = vunpack.c.h.b16 %v187
        %v449 = vunpack.c.l.b16 %v188
        %v450 = vunpack.c.h.b16 %v188
        %v451 = vunpack.c.l.b16 %v189
        %v452 = vunpack.c.h.b16 %v189
        %v453 = vunpack.c.l.b16 %v190
        %v454 = vunpack.c.h.b16 %v190
        %v455 = vunpack.c.l.b16 %v191
        %v456 = vunpack.c.h.b16 %v191
        %v457 = vunpack.c.l.b16 %v192
        %v458 = vunpack.c.h.b16 %v192
        %v459 = vunpack.c.l.b16 %v193
        %v460 = vunpack.c.h.b16 %v193
        %v461 = vunpack.c.l.b16 %v194
        %v462 = vunpack.c.h.b16 %v194
        %v463 = vunpack.c.l.b16 %v195
        %v464 = vunpack.c.h.b16 %v195
        %v465 = vunpack.c.l.b16 %v196
        %v466 = vunpack.c.h.b16 %v196
        %v467 = vunpack.c.l.b16 %v197
        %v468 = vunpack.c.h.b16 %v197
        %v469 = vunpack.c.l.b16 %v198
        %v470 = vunpack.c.h.b16 %v198
        %v471 = vunpack.c.l.b16 %v199
        %v472 = vunpack.c.h.b16 %v199
        %v473 = vunpack.c.l.b16 %v200
        %v474 = vunpack.c.h.b16 %v200
        %v475 = vunpack.c.l.b16 %v201
        %v476 = vunpack.c.h.b16 %v201
        %v477 = vunpack.c.l.b16 %v202
        %v478 = vunpack.c.h.b16 %v202
        %v479 = vunpack.c.l.b16 %v203
        %v480 = vunpack.c.h.b16 %v203
        %v481 = vunpack.c.l.b16 %v204
        %v482 = vunpack.c.h.b16 %v204
        %v483 = vunpack.c.l.b16 %v205
        %v484 = vunpack.c.h.b16 %v205
        %v485 = vunpack.c.l.b16 %v206
        %v486 = vunpack.c.h.b16 %v206
        %v487 = vunpack.c.l.b16 %v207
        %v488 = vunpack.c.h.b16 %v207
        %v489 = vunpack.c.l.b16 %v208
        %v490 = vunpack.c.h.b16 %v208
        %v491 = vunpack.c.l.b16 %v209
        %v492 = vunpack.c.h.b16 %v209
        %v493 = vunpack.c.l.b16 %v210
        %v494 = vunpack.c.h.b16 %v210
        %v495 = vunpack.c.l.b16 %v211
        %v496 = vunpack.c.h.b16 %v211
        %v497 = vunpack.c.l.b16 %v212
        %v498 = vunpack.c.h.b16 %v212
        %v499 = vunpack.c.l.b16 %v213
        %v500 = vunpack.c.h.b16 %v213
        %v501 = vunpack.c.l.b16 %v214
        %v502 = vunpack.c.h.b16 %v214
        %v503 = vunpack.c.l.b16 %v215
        %v504 = vunpack.c.h.b16 %v215
        %v505 = vunpack.c.l.b16 %v216
        %v506 = vunpack.c.h.b16 %v216
        %v507 = vunpack.c.l.b16 %v217
        %v508 = vunpack.c.h.b16 %v217
        %v509 = vunpack.c.l.b16 %v218
        %v510 = vunpack.c.h.b16 %v218
        %v511 = vunpack.c.l.b16 %v219
        %v512 = vunpack.c.h.b16 %v219
        %v513 = vunpack.c.l.b16 %v220
        %v514 = vunpack.c.h.b16 %v220
        %v515 = vunpack.c.l.b16 %v221
        %v516 = vunpack.c.h.b16 %v221
        %v517 = vunpack.c.l.b16 %v222
        %v518 = vunpack.c.h.b16 %v222
        %v519 = vunpack.c.l.b16 %v223
        %v520 = vunpack.c.h.b16 %v223
        %v521 = vunpack.c.l.b16 %v224
        %v522 = vunpack.c.h.b16 %v224
        %v523 = vunpack.c.l.b16 %v225
        %v524 = vunpack.c.h.b16 %v225
        %v525 = vunpack.c.l.b16 %v226
        %v526 = vunpack.c.h.b16 %v226
        %v527 = vunpack.c.l.b16 %v227
        %v528 = vunpack.c.h.b16 %v227
        %v529 = vunpack.c.l.b16 %v228
        %v530 = vunpack.c.h.b16 %v228
        %v531 = vunpack.c.l.b16 %v229
        %v532 = vunpack.c.h.b16 %v229
        %v533 = vunpack.c.l.b16 %v230
        %v534 = vunpack.c.h.b16 %v230
        %v535 = vunpack.c.l.b16 %v231
        %v536 = vunpack.c.h.b16 %v231
        %v537 = vunpack.c.l.b16 %v232
        %v538 = vunpack.c.h.b16 %v232
        %v539 = vunpack.c.l.b16 %v233
        %v540 = vunpack.c.h.b16 %v233
        %v541 = vunpack.c.l.b16 %v234
        %v542 = vunpack.c.h.b16 %v234
        %v543 = vunpack.c.l.b16 %v235
        %v544 = vunpack.c.h.b16 %v235
        %v545 = vunpack.c.l.b16 %v236
        %v546 = vunpack.c.h.b16 %v236
        %v547 = vunpack.c.l.b16 %v237
        %v548 = vunpack.c.h.b16 %v237
        %v549 = vunpack.c.l.b16 %v238
        %v550 = vunpack.c.h.b16 %v238
        %v551 = vunpack.c.l.b16 %v239
        %v552 = vunpack.c.h.b16 %v239
        %v553 = vunpack.c.l.b16 %v240
        %v554 = vunpack.c.h.b16 %v240
        %v555 = vunpack.c.l.b16 %v241
        %v556 = vunpack.c.h.b16 %v241
        %v557 = vunpack.c.l.b16 %v242
        %v558 = vunpack.c.h.b16 %v242
        %v559 = vunpack.c.l.b16 %v243
        %v560 = vunpack.c.h.b16 %v243
        %v561 = vunpack.c.l.b16 %v244
        %v562 = vunpack.c.h.b16 %v244
        %v563 = vunpack.c.l.b16 %v245
        %v564 = vunpack.c.h.b16 %v245
        %v565 = vunpack.c.l.b16 %v246
        %v566 = vunpack.c.h.b16 %v246
        %v567 = vunpack.c.l.b16 %v247
        %v568 = vunpack.c.h.b16 %v247
        %v569 = vunpack.c.l.b16 %v248
        %v570 = vunpack.c.h.b16 %v248
        %v571 = vpack.c.b16 %v397, %v395
        %v572 = vpack.c.b16 %v398, %v396
        %v573 = vpack.c.b16 %v401, %v399
        %v574 = vpack.c.b16 %v402, %v400
        %v575 = vpack.c.b16 %v405, %v403
        %v576 = vpack.c.b16 %v406, %v404
        %v577 = vpack.c.b16 %v409, %v407
        %v578 = vpack.c.b16 %v410, %v408
        %v579 = vpack.c.b16 %v413, %v411
        %v580 = vpack.c.b16 %v414, %v412
        %v581 = vpack.c.b16 %v417, %v415
        %v582 = vpack.c.b16 %v418, %v416
        %v583 = vpack.c.b16 %v421, %v419
        %v584 = vpack.c.b16 %v422, %v420
        %v585 = vpack.c.b16 %v425, %v423
        %v586 = vpack.c.b16 %v426, %v424
        %v587 = vpack.c.b16 %v429, %v427
        %v588 = vpack.c.b16 %v430, %v428
        %v589 = vpack.c.b16 %v433, %v431
        %v590 = vpack.c.b16 %v434, %v432
        %v591 = vpack.c.b16 %v437, %v435
        %v592 = vpack.c.b16 %v438, %v436
        %v593 = vpack.c.b16 %v441, %v439
        %v594 = vpack.c.b16 %v442, %v440
        %v595 = vpack.c.b16 %v445, %v443
        %v596 = vpack.c.b16 %v446, %v444
        %v597 = vpack.c.b16 %v449, %v447
        %v598 = vpack.c.b16 %v450, %v448
        %v599 = vpack.c.b16 %v453, %v451
        %v600 = vpack.c.b16 %v454, %v452
        %v601 = vpack.c.b16 %v457, %v455
        %v602 = vpack.c.b16 %v458, %v456
        %v603 = vpack.c.b16 %v461, %v459
        %v604 = vpack.c.b16 %v462, %v460
        %v605 = vpack.c.b16 %v465, %v463
        %v606 = vpack.c.b16 %v466, %v464
        %v607 = vpack.c.b16 %v469, %v467
        %v608 = vpack.c.b16 %v470, %v468
        %v609 = vpack.c.b16 %v473, %v471
        %v610 = vpack.c.b16 %v474, %v472
        %v611 = vpack.c.b16 %v477, %v475
        %v612 = vpack.c.b16 %v478, %v476
        %v613 = vpack.c.b16 %v481, %v479
        %v614 = vpack.c.b16 %v482, %v480
        %v615 = vpack.c.b16 %v485, %v483
        %v616 = vpack.c.b16 %v486, %v484
        %v617 = vpack.c.b16 %v489, %v487
        %v618 = vpack.c.b16 %v490, %v488
        %v619 = vpack.c.b16 %v493, %v491
        %v620 = vpack.c.b16 %v494, %v492
        %v621 = vpack.c.b16 %v497, %v495
        %v622 = vpack.c.b16 %v498, %v496
        %v623 = vpack.c.b16 %v501, %v499
        %v624 = vpack.c.b16 %v502, %v500
        %v625 = vpack.c.b16 %v505, %v503
        %v626 = vpack.c.b16 %v506, %v504
        %v627 = vpack.c.b16 %v509, %v507
        %v628 = vpack.c.b16 %v510, %v508
        %v629 = vpack.c.b16 %v513, %v511
        %v630 = vpack.c.b16 %v514, %v512
        %v631 = vpack.c.b16 %v517, %v515
        %v632 = vpack.c.b16 %v518, %v516
        %v633 = vpack.c.b16 %v521, %v519
        %v634 = vpack.c.b16 %v522, %v520
        %v635 = vpack.c.b16 %v525, %v523
        %v636 = vpack.c.b16 %v526, %v524
        %v637 = vpack.c.b16 %v529, %v527
        %v638 = vpack.c.b16 %v530, %v528
        %v639 = vpack.c.b16 %v533, %v531
        %v640 = vpack.c.b16 %v534, %v532
        %v641 = vpack.c.b16 %v537, %v535
        %v642 = vpack.c.b16 %v538, %v536
        %v643 = vpack.c.b16 %v541, %v539
        %v644 = vpack.c.b16 %v542, %v540
        %v645 = vpack.c.b16 %v545, %v543
        %v646 = vpack.c.b16 %v546, %v544
        %v647 = vpack.c.b16 %v549, %v547
        %v648 = vpack.c.b16 %v550, %v548
        %v649 = vpack.c.b16 %v553, %v551
        %v650 = vpack.c.b16 %v554, %v552
        %v651 = vpack.c.b16 %v557, %v555
        %v652 = vpack.c.b16 %v558, %v556
        %v653 = vpack.c.b16 %v561, %v559
        %v654 = vpack.c.b16 %v562, %v560
        %v655 = vpack.c.b16 %v565, %v563
        %v656 = vpack.c.b16 %v566, %v564
        %v657 = vpack.c.b16 %v569, %v567
        %v658 = vpack.c.b16 %v570, %v568
        %vm747 = vcmask 523264
        %v749 = vsel %vm747, %v290, 0
        %v752 = vsel %vm747, %v296, 0
        %754 = vmatprep.subr.bf16.mxu0 %v586
        %755 = vmatpush1.bf16.msra.mxu0 %v585
        %756 = vmatprep.subr.bf16.mxu0 %v584
        %757 = vmatpush1.bf16.msra.mxu0 %v583
        %758 = vmatprep.subr.bf16.mxu0 %v582
        %759 = vmatpush1.bf16.msra.mxu0 %v581
        %760 = vmatprep.subr.bf16.mxu0 %v580
        %761 = vmatpush1.bf16.msra.mxu0 %v579
        %762 = vmatprep.subr.bf16.mxu0 %v578
        %763 = vmatpush1.bf16.msra.mxu0 %v577
        %764 = vmatprep.subr.bf16.mxu0 %v576
        %765 = vmatpush1.bf16.msra.mxu0 %v575
        %766 = vmatprep.subr.bf16.mxu0 %v574
        %767 = vmatpush1.bf16.msra.mxu0 %v573
        %768 = vmatprep.subr.bf16.mxu0 %v572
        %769 = vmatpush1.bf16.msra.mxu0 %v571
        %770 = vmatprep.subr.bf16.mxu0 %v602
        %771 = vmatpush2.bf16.msra.mxu0 %v601
        %772 = vmatprep.subr.bf16.mxu0 %v600
        %773 = vmatpush2.bf16.msra.mxu0 %v599
        %774 = vmatprep.subr.bf16.mxu0 %v598
        %775 = vmatpush2.bf16.msra.mxu0 %v597
        %776 = vmatprep.subr.bf16.mxu0 %v596
        %777 = vmatpush2.bf16.msra.mxu0 %v595
        %778 = vmatprep.subr.bf16.mxu0 %v594
        %779 = vmatpush2.bf16.msra.mxu0 %v593
        %780 = vmatprep.subr.bf16.mxu0 %v592
        %781 = vmatpush2.bf16.msra.mxu0 %v591
        %782 = vmatprep.subr.bf16.mxu0 %v590
        %783 = vmatpush2.bf16.msra.mxu0 %v589
        %784 = vmatprep.subr.bf16.mxu0 %v588
        %785 = vmatpush2.bf16.msra.mxu0 %v587
        %786 = vmatprep.mubr.bf16.mxu0 %v286
        %787 = vmatmul.mubr.bf16.gmra.mxu0 %v285
        %v788 = vpop.f32.mrf.mxu0
        %v789 = vadd.f32 0.0, %v788
        %v790 = vpop.f32.mrf.mxu0
        %v791 = vadd.f32 0.0, %v790
        %v792 = vpop.f32.mrf.mxu0
        %v793 = vadd.f32 0.0, %v792
        %v794 = vpop.f32.mrf.mxu0
        %v795 = vadd.f32 0.0, %v794
        %796 = vmatprep.mubr.bf16.mxu0 %v292
        %797 = vmatmul.mubr.bf16.gmra.mxu0 %v291
        %v798 = vpop.f32.mrf.mxu0
        %v799 = vadd.f32 0.0, %v798
        %v800 = vpop.f32.mrf.mxu0
        %v801 = vadd.f32 0.0, %v800
        %v802 = vpop.f32.mrf.mxu0
        %v803 = vadd.f32 0.0, %v802
        %v804 = vpop.f32.mrf.mxu0
        %v805 = vadd.f32 0.0, %v804
        %806 = vdwg.mxu0
        %807 = vmatprep.subr.bf16.mxu0 %v618
        %808 = vmatpush1.bf16.msra.mxu0 %v617
        %809 = vmatprep.subr.bf16.mxu0 %v616
        %810 = vmatpush1.bf16.msra.mxu0 %v615
        %811 = vmatprep.subr.bf16.mxu0 %v614
        %812 = vmatpush1.bf16.msra.mxu0 %v613
        %813 = vmatprep.subr.bf16.mxu0 %v612
        %814 = vmatpush1.bf16.msra.mxu0 %v611
        %815 = vmatprep.subr.bf16.mxu0 %v610
        %816 = vmatpush1.bf16.msra.mxu0 %v609
        %817 = vmatprep.subr.bf16.mxu0 %v608
        %818 = vmatpush1.bf16.msra.mxu0 %v607
        %819 = vmatprep.subr.bf16.mxu0 %v606
        %820 = vmatpush1.bf16.msra.mxu0 %v605
        %821 = vmatprep.subr.bf16.mxu0 %v604
        %822 = vmatpush1.bf16.msra.mxu0 %v603
        %823 = vmatprep.subr.bf16.mxu0 %v634
        %824 = vmatpush2.bf16.msra.mxu0 %v633
        %825 = vmatprep.subr.bf16.mxu0 %v632
        %826 = vmatpush2.bf16.msra.mxu0 %v631
        %827 = vmatprep.subr.bf16.mxu0 %v630
        %828 = vmatpush2.bf16.msra.mxu0 %v629
        %829 = vmatprep.subr.bf16.mxu0 %v628
        %830 = vmatpush2.bf16.msra.mxu0 %v627
        %831 = vmatprep.subr.bf16.mxu0 %v626
        %832 = vmatpush2.bf16.msra.mxu0 %v625
        %833 = vmatprep.subr.bf16.mxu0 %v624
        %834 = vmatpush2.bf16.msra.mxu0 %v623
        %835 = vmatprep.subr.bf16.mxu0 %v622
        %836 = vmatpush2.bf16.msra.mxu0 %v621
        %837 = vmatprep.subr.bf16.mxu0 %v620
        %838 = vmatpush2.bf16.msra.mxu0 %v619
        %839 = vmatprep.mubr.bf16.mxu0 %v288
        %840 = vmatmul.mubr.bf16.gmra.mxu0 %v287
        %v841 = vpop.f32.mrf.mxu0
        %v842 = vadd.f32 %v789, %v841
        %v843 = vpop.f32.mrf.mxu0
        %v844 = vadd.f32 %v791, %v843
        %v845 = vpop.f32.mrf.mxu0
        %v846 = vadd.f32 %v793, %v845
        %v847 = vpop.f32.mrf.mxu0
        %v848 = vadd.f32 %v795, %v847
        %849 = vmatprep.mubr.bf16.mxu0 %v294
        %850 = vmatmul.mubr.bf16.gmra.mxu0 %v293
        %v851 = vpop.f32.mrf.mxu0
        %v852 = vadd.f32 %v799, %v851
        %v853 = vpop.f32.mrf.mxu0
        %v854 = vadd.f32 %v801, %v853
        %v855 = vpop.f32.mrf.mxu0
        %v856 = vadd.f32 %v803, %v855
        %v857 = vpop.f32.mrf.mxu0
        %v858 = vadd.f32 %v805, %v857
        %859 = vdwg.mxu0
        %860 = vmatprep.subr.bf16.mxu0 %v650
        %861 = vmatpush1.bf16.msra.mxu0 %v649
        %862 = vmatprep.subr.bf16.mxu0 %v648
        %863 = vmatpush1.bf16.msra.mxu0 %v647
        %864 = vmatprep.subr.bf16.mxu0 %v646
        %865 = vmatpush1.bf16.msra.mxu0 %v645
        %866 = vmatprep.subr.bf16.mxu0 %v644
        %867 = vmatpush1.bf16.msra.mxu0 %v643
        %868 = vmatprep.subr.bf16.mxu0 %v642
        %869 = vmatpush1.bf16.msra.mxu0 %v641
        %870 = vmatprep.subr.bf16.mxu0 %v640
        %871 = vmatpush1.bf16.msra.mxu0 %v639
        %872 = vmatprep.subr.bf16.mxu0 %v638
        %873 = vmatpush1.bf16.msra.mxu0 %v637
        %874 = vmatprep.subr.bf16.mxu0 %v636
        %875 = vmatpush1.bf16.msra.mxu0 %v635
        %876 = vmatprep.subr.bf16.mxu0 0
        %877 = vmatpush2.bf16.msra.mxu0 0
        %878 = vmatprep.subr.bf16.mxu0 0
        %879 = vmatpush2.bf16.msra.mxu0 0
        %880 = vmatprep.subr.bf16.mxu0 0
        %881 = vmatpush2.bf16.msra.mxu0 0
        %882 = vmatprep.subr.bf16.mxu0 0
        %883 = vmatpush2.bf16.msra.mxu0 0
        %884 = vmatprep.subr.bf16.mxu0 %v658
        %885 = vmatpush2.bf16.msra.mxu0 %v657
        %886 = vmatprep.subr.bf16.mxu0 %v656
        %887 = vmatpush2.bf16.msra.mxu0 %v655
        %888 = vmatprep.subr.bf16.mxu0 %v654
        %889 = vmatpush2.bf16.msra.mxu0 %v653
        %890 = vmatprep.subr.bf16.mxu0 %v652
        %891 = vmatpush2.bf16.msra.mxu0 %v651
        %892 = vmatprep.mubr.bf16.mxu0 %v749
        %893 = vmatmul.mubr.bf16.gmra.mxu0 %v289
        %v894 = vpop.f32.mrf.mxu0
        %v895 = vadd.f32 %v842, %v894
        %v896 = vpop.f32.mrf.mxu0
        %v897 = vadd.f32 %v844, %v896
        %v898 = vpop.f32.mrf.mxu0
        %v899 = vadd.f32 %v846, %v898
        %v900 = vpop.f32.mrf.mxu0
        %v901 = vadd.f32 %v848, %v900
        %902 = vmatprep.mubr.bf16.mxu0 %v752
        %903 = vmatmul.mubr.bf16.gmra.mxu0 %v295
        %v904 = vpop.f32.mrf.mxu0
        %v905 = vadd.f32 %v852, %v904
        %v906 = vpop.f32.mrf.mxu0
        %v907 = vadd.f32 %v854, %v906
        %v908 = vpop.f32.mrf.mxu0
        %v909 = vadd.f32 %v856, %v908
        %v910 = vpop.f32.mrf.mxu0
        %v911 = vadd.f32 %v858, %v910
        %912 = vdwg.mxu0
        %913 = vst [vmem:[%s139] sm:$0xff] %v895
        %914 = vst.msk [vmem:[%s139 + $0x8] sm:$0xff] %vm747, %v897
        %915 = vst [vmem:[%s139 + $0x10] sm:$0xff] %v899
        %916 = vst.msk [vmem:[%s139 + $0x18] sm:$0xff] %vm747, %v901
        %917 = vst [vmem:[%s139 + $0x20] sm:$0xff] %v905
        %918 = vst.msk [vmem:[%s139 + $0x28] sm:$0xff] %vm747, %v907
        %919 = vst [vmem:[%s139 + $0x30] sm:$0xff] %v909
        %920 = vst.msk [vmem:[%s139 + $0x38] sm:$0xff] %vm747, %v911
        %s921 = sand.u32 %s71, 1
        %s922 = scalar_lea.sflag [#allocation3], %s921
        %s923 = sand.u32 %s71, 1
        %s924 = smul.addr %s923, 64
        %s925 = scalar_lea.vmem [#allocation2], %s924
        // Predicated region
        $region29: #{tpu_custom_call.1} parent=27 // pred_check
          %p926 = pneg %p81
        $region30: #{tpu_custom_call.1} parent=27 // pred_check_branch
          %928 = sbr.rel (%p926) target = $region32
        $region31: #{tpu_custom_call.1} parent=27 // pred_region
          %s929 = smul.u32 4, %s16
          %s931 = ssub.s32 1024, 1024
          %932 = vsyncadd %s922, %s931
          %s933 = smul.addr %s929, 2
          %s934 = smul.addr %s933, 128
          %s935 = scalar_lea.hbm %s2, %s934
          %s936 = sshll.u32 %s925, 4
          %s937 = int_to_ptr.vmem [resolvable:$true] %s936
          %942 = dma.vmem_to_hbm [thread:$0]  %s937, 1024, %s935, %s922, 256, 256, 16
        $region32: #{tpu_custom_call.1} parent=27 // pred_fallthru
          _
      $region28: #{tpu_custom_call.1} parent=5 // pred_fallthru
        _
      %p943 = scmp.le.s32.totalorder 2, %s11
      // Predicated region
      $region33: #{tpu_custom_call.1} parent=5 // pred_check
        %p944 = pneg %p943
      $region34: #{tpu_custom_call.1} parent=5 // pred_check_branch
        %946 = sbr.rel (%p944) target = $region36
      $region35: #{tpu_custom_call.1} parent=5 // pred_region
        %s947 = ssub.s32 %s11, 2
        // Predicated region
        $region37: #{tpu_custom_call.1} parent=35 // pred_check
          %p948 = pneg %p87
        $region38: #{tpu_custom_call.1} parent=35 // pred_check_branch
          %950 = sbr.rel (%p948) target = $region40
        $region39: #{tpu_custom_call.1} parent=35 // pred_region
          %s951 = sand.u32 %s72, 1
          %s952 = scalar_lea.sflag [#allocation3], %s951
          %s953 = sand.u32 %s72, 1
          %s954 = smul.addr %s953, 64
          %s955 = scalar_lea.vmem [#allocation2], %s954
          %956 = dma.done %s952, 1024
        $region40: #{tpu_custom_call.1} parent=35 // pred_fallthru
          _
      $region36: #{tpu_custom_call.1} parent=5 // pred_fallthru
        _
    $region6: #{tpu_custom_call.1} parent=1 // loop_footer
      %s15 = sadd.s32 1, %s11
    $region7: #{tpu_custom_call.1} parent=1 // loop_footer_branch
      %10 = sbr.rel target = $region3
    $region8: #{tpu_custom_call.1} parent=1 // loop_exit
      _
    %957 = vsyncpa [#allocation3], 1
    %s958 = scalar_lea.sflag [#allocation3], 1
    %959 = vsyncpa %s958, 1

</llo_original>
